<compile_context>
chip_gen: v6e
topology: v6e:2x2x1
jax: 0.10.0
libtpu: 0.0.40
codegen_flags: <defaults>
</compile_context>

<pallas_src>
import functools

import jax
import jax.numpy as jnp
from jax.experimental import pallas as pl
from jax.experimental.pallas import tpu as pltpu


# ---------------------------------------------------------------------------
# helpers
# ---------------------------------------------------------------------------
def _round_up(x, m):
    return (x + m - 1) // m * m


def _vmem_limit_bytes():
    """75% of physical VMEM, capped; falls back to a v7x-safe value."""
    try:
        cap = int(pltpu.get_tpu_info().vmem_capacity_bytes)
    except Exception:
        cap = 64 * 1024 * 1024
    return int(min(cap * 3 // 4, 100 * 1024 * 1024))


# ---------------------------------------------------------------------------
# Kernel 1: gather formulation (V >> T).  Manual double-buffered row DMAs.
# ---------------------------------------------------------------------------
def bow_gather_kernel(ids_ref, emb_hbm, bias_ref, out_ref, buf, sem, acc_ref):
    # ids_ref : (Bp, T)   int32, SMEM (scalar prefetch)
    # emb_hbm : (V, Dp)   f32, HBM (memory_space=pl.ANY)
    # bias_ref: (1, Dp)   f32, VMEM
    # out_ref : (Bt, Dp)  f32, VMEM (one batch tile)
    # buf     : (2, 1, Dp) f32 VMEM double buffer;  sem: DMA((2,));  acc: (1, Dp)
    g = pl.program_id(0)
    bt = out_ref.shape[0]          # rows per batch tile (static)
    seq = ids_ref.shape[1]         # T (static)

    for r in range(bt):            # static unroll over the few rows of the tile
        row = g * bt + r

        def fetch(t, slot, row=row):
            pltpu.make_async_copy(
                emb_hbm.at[pl.ds(ids_ref[row, t], 1), :],
                buf.at[slot], sem.at[slot]).start()

        fetch(0, 0)
        acc_ref[...] = jnp.zeros_like(acc_ref)

        @pl.loop(0, seq)
        def _token(t, fetch=fetch):
            slot = t & 1
            pltpu.make_async_copy(emb_hbm.at[pl.ds(0, 1), :],
                                  buf.at[slot], sem.at[slot]).wait()

            @pl.when(t + 1 < seq)
            def _():
                fetch(t + 1, 1 - slot)

            acc_ref[...] += buf[slot]

        out_ref[r:r + 1, :] = acc_ref[...] + bias_ref[...]


@jax.jit
def _bow_gather(ids, embed_table, bias):
    B, T = ids.shape
    V, D = embed_table.shape
    Dp = _round_up(D, 128)
    Bt = 8                                   # sublane-aligned rows per grid step
    Bp = _round_up(B, Bt)
    vmem_limit = _vmem_limit_bytes()

    ids_p = jnp.pad(ids.astype(jnp.int32), ((0, Bp - B), (0, 0)))
    emb_p = jnp.pad(embed_table, ((0, 0), (0, Dp - D)))
    bias_p = jnp.pad(bias.reshape(1, D), ((0, 0), (0, Dp - D)))

    out = pl.pallas_call(
        bow_gather_kernel,
        out_shape=jax.ShapeDtypeStruct((Bp, Dp), jnp.float32),
        grid_spec=pltpu.PrefetchScalarGridSpec(
            num_scalar_prefetch=1,
            grid=(Bp // Bt,),
            in_specs=[
                pl.BlockSpec(memory_space=pl.ANY),              # table in HBM
                pl.BlockSpec((1, Dp), lambda g, ids: (0, 0)),   # bias
            ],
            out_specs=pl.BlockSpec((Bt, Dp), lambda g, ids: (g, 0)),
            scratch_shapes=[
                pltpu.VMEM((2, 1, Dp), jnp.float32),            # row double buffer
                pltpu.SemaphoreType.DMA((2,)),
                pltpu.VMEM((1, Dp), jnp.float32),               # per-row accumulator
            ]),
        compiler_params=pltpu.CompilerParams(
            dimension_semantics=("parallel",),
            vmem_limit_bytes=vmem_limit),
    )(ids_p, emb_p, bias_p)

    return out[:B, :D]


# ---------------------------------------------------------------------------
# Kernel 2: counts @ E matmul formulation (small vocab).
# ---------------------------------------------------------------------------
def bow_matmul_kernel(ids_ref, emb_ref, bias_ref, out_ref):
    # ids_ref : (Bt, T)  int32 -- token ids for this batch tile (resident over k)
    # emb_ref : (Vt, Dp) f32   -- one streamed vocab tile of the table
    # bias_ref: (1, Dp)  f32
    # out_ref : (Bt, Dp) f32   -- resident across the vocab grid axis (accumulator)
    k = pl.program_id(1)

    @pl.when(k == 0)
    def _():
        out_ref[...] = jnp.zeros_like(out_ref)

    ids = ids_ref[...]                          # (Bt, T)
    Bt, T = ids.shape
    Vt = emb_ref.shape[0]

    # k-independent local iota; shift the ids instead of the iota.
    local_iota = jax.lax.broadcasted_iota(jnp.int32, (Bt, Vt), 1)
    ids_local = ids - k * Vt                    # (Bt, T)

    # counts[b, v] = #{t : ids[b, t] == v + k*Vt}; int32 accumulation over the
    # short static T loop, one conversion after the loop.
    counts = jnp.zeros((Bt, Vt), jnp.int32)
    for t in range(T):
        counts = counts + (ids_local[:, t:t + 1] == local_iota)

    # bf16 counts are exact for T <= 256 (asserted in the wrapper); bf16 x bf16
    # with f32 accumulation runs the MXU at full rate on all generations.
    out_ref[...] += jnp.dot(counts.astype(jnp.bfloat16),
                            emb_ref[...].astype(jnp.bfloat16),
                            preferred_element_type=jnp.float32)

    @pl.when(k == pl.num_programs(1) - 1)
    def _():
        out_ref[...] += bias_ref[...]


@functools.partial(jax.jit, static_argnames=("block_b", "block_v"))
def _bow_matmul(ids, embed_table, bias, *, block_b=128, block_v=None):
    B, T = ids.shape
    V, D = embed_table.shape
    assert T <= 256, "bf16 counts are exact only for T <= 256"

    vmem_limit = _vmem_limit_bytes()
    Dp = _round_up(D, 128)

    # Batch tile: multiple of 8 sublanes; aim for >= 2 batch tiles so the
    # "parallel" axis spans both TensorCores on v7x.
    Bt = min(block_b, max(8, _round_up(-(-B // 2), 8)))
    Bp = _round_up(B, Bt)

    # Vocab (contraction) tile from a VMEM budget: double-buffered f32 tile
    # costs 2*Vt*Dp*4 bytes; leave room for out / ids / bias.
    if block_v is None:
        emb_budget = vmem_limit // 3
        block_v = max(128, min(2048, (emb_budget // (2 * Dp * 4)) // 128 * 128))
    Vt = min(block_v, _round_up(V, 128))
    Vp = _round_up(V, Vt)

    ids_p = jnp.pad(ids.astype(jnp.int32), ((0, Bp - B), (0, 0)))
    emb_p = jnp.pad(embed_table, ((0, Vp - V), (0, Dp - D)))
    bias_p = jnp.pad(bias.reshape(1, D), ((0, 0), (0, Dp - D)))

    grid = (Bp // Bt, Vp // Vt)                 # (batch tiles, vocab tiles)

    out = pl.pallas_call(
        bow_matmul_kernel,
        out_shape=jax.ShapeDtypeStruct((Bp, Dp), jnp.float32),
        grid=grid,
        in_specs=[
            pl.BlockSpec((Bt, T), lambda i, k: (i, 0)),    # ids (resident over k)
            pl.BlockSpec((Vt, Dp), lambda i, k: (k, 0)),   # streamed table tile
            pl.BlockSpec((1, Dp), lambda i, k: (0, 0)),    # bias
        ],
        out_specs=pl.BlockSpec((Bt, Dp), lambda i, k: (i, 0)),
        compiler_params=pltpu.CompilerParams(
            dimension_semantics=("parallel", "arbitrary"),
            vmem_limit_bytes=vmem_limit),
    )(ids_p, emb_p, bias_p)

    return out[:B, :D]


# ---------------------------------------------------------------------------
# Dispatching wrapper (forward pass of the BOW module).
# ---------------------------------------------------------------------------
def bow_forward(ids, embed_table, bias, *, mode="auto", block_b=128, block_v=None):
    """ids: [B, T] int; embed_table: [V, D] f32; bias: [D] f32 -> [B, D] f32."""
    B, T = ids.shape
    V, D = embed_table.shape
    if mode == "auto":
        # Gather is O(B*T*D) HBM traffic vs streaming the whole table per
        # batch tile for the matmul form -> prefer it whenever V >> T.
        mode = "gather" if V > 16 * T else "matmul"
    if mode == "gather":
        return _bow_gather(ids, embed_table, bias)
    return _bow_matmul(ids, embed_table, bias, block_b=block_b, block_v=block_v)


if __name__ == "__main__":
    # Small, deterministic shapes consistent with the module's forward.
    vocab_size = 64      # V
    embedding_dim = 32   # D
    batch = 2            # B
    seq = 8              # T

    key = jax.random.PRNGKey(0)
    k_emb, k_ids, k_emb2, k_ids2, k_bias2 = jax.random.split(key, 5)

    # nn.Embedding default init ~ N(0,1); bias param initialized to zeros.
    embed_table = jax.random.normal(k_emb, (vocab_size, embedding_dim),
                                    dtype=jnp.float32)
    bias = jnp.zeros((embedding_dim,), dtype=jnp.float32)
    ids = jax.random.randint(k_ids, (batch, seq), 0, vocab_size, dtype=jnp.int32)
    ref = jnp.take(embed_table, ids, axis=0).sum(axis=1) + bias

    # auto -> matmul path here (V/T == 8); bf16 MXU math -> loose tolerance.
    out_mm = jax.block_until_ready(bow_forward(ids, embed_table, bias))
    assert out_mm.shape == (batch, embedding_dim)
    assert jnp.allclose(out_mm, ref, atol=5e-2, rtol=5e-2)

    # Forced gather path on the same inputs (exact f32 math).
    out_g = jax.block_until_ready(bow_forward(ids, embed_table, bias, mode="gather"))
    assert jnp.allclose(out_g, ref, atol=1e-5, rtol=1e-5)

    # Second small config: multi-tile batch grid, non-zero bias, non-aligned
    # V/D/B; auto -> gather here (V/T ~ 37).
    V2, D2, B2, T2 = 300, 40, 20, 8
    emb2 = jax.random.normal(k_emb2, (V2, D2), dtype=jnp.float32)
    bias2 = jax.random.normal(k_bias2, (D2,), dtype=jnp.float32)
    ids2 = jax.random.randint(k_ids2, (B2, T2), 0, V2, dtype=jnp.int32)
    ref2 = jnp.take(emb2, ids2, axis=0).sum(axis=1) + bias2

    out2_g = jax.block_until_ready(bow_forward(ids2, emb2, bias2))
    assert out2_g.shape == (B2, D2)
    assert jnp.allclose(out2_g, ref2, atol=1e-4, rtol=1e-4)

    # Forced matmul path with a small vocab tile to exercise the multi-step
    # vocab accumulation (init at k==0, bias add at k==last).
    out2_mm = jax.block_until_ready(
        bow_forward(ids2, emb2, bias2, mode="matmul", block_b=8, block_v=128))
    assert jnp.allclose(out2_mm, ref2, atol=5e-2, rtol=5e-2)

    print("KERNEL_OK")
</pallas_src>

<mosaic_0001>
module attributes {stable_mosaic.version = 11 : i64} {
  func.func @bow_matmul_kernel(%arg0: i32, %arg1: i32, %arg2: memref<8x8xi32, #tpu.memory_space<vmem>>, %arg3: memref<128x128xf32, #tpu.memory_space<vmem>>, %arg4: memref<1x128xf32, #tpu.memory_space<vmem>>, %arg5: memref<8x128xf32, #tpu.memory_space<vmem>>) attributes {dimension_semantics = [#tpu.dimension_semantics<parallel>, #tpu.dimension_semantics<arbitrary>], iteration_bounds = array<i64: 1, 1>, scalar_prefetch = 0 : i64, scratch_operands = 0 : i64, tpu.core_type = #tpu.core_type<tc>, window_params = [{transform_indices = @transform_0, window_bounds = array<i64: 8, 8>}, {transform_indices = @transform_1, window_bounds = array<i64: 128, 128>}, {pipeline_mode = #tpu.pipeline_mode<synchronous>, transform_indices = @transform_2, window_bounds = array<i64: 1, 128>}, {transform_indices = @transform_3, window_bounds = array<i64: 8, 128>}]} {
    %c0_i32 = arith.constant 0 : i32
    %0 = arith.cmpi eq, %arg1, %c0_i32 : i32
    %1 = arith.extui %0 : i1 to i32
    %c0_i32_0 = arith.constant 0 : i32
    %2 = arith.cmpi ne, %1, %c0_i32_0 : i32
    scf.if %2 {
      %cst_11 = arith.constant 0.000000e+00 : f32
      %59 = vector.broadcast %cst_11 : f32 to vector<8x128xf32>
      %c0_12 = arith.constant 0 : index
      %c0_13 = arith.constant 0 : index
      %60 = vector.load %arg5[%c0_12, %c0_13] : memref<8x128xf32, #tpu.memory_space<vmem>>, vector<8x128xf32>
      tpu.vector_store %arg5[%c0_12, %c0_13], %59 {strides = array<i32>} : memref<8x128xf32, #tpu.memory_space<vmem>>, vector<8x128xf32>,
    } else {
    }
    %c0 = arith.constant 0 : index
    %c0_1 = arith.constant 0 : index
    %3 = vector.load %arg2[%c0, %c0_1] : memref<8x8xi32, #tpu.memory_space<vmem>>, vector<8x8xi32>
    %4 = tpu.iota {dimensions = array<i32: 1>} : vector<8x128xi32>
    %c128_i32 = arith.constant 128 : i32
    %5 = arith.muli %arg1, %c128_i32 : i32
    %6 = vector.broadcast %5 : i32 to vector<8x8xi32>
    %7 = arith.subi %3, %6 : vector<8x8xi32>
    %c0_i32_2 = arith.constant 0 : i32
    %8 = vector.broadcast %c0_i32_2 : i32 to vector<8x128xi32>
    %9 = vector.extract_strided_slice %7 {offsets = [0, 0], sizes = [8, 1], strides = [1, 1]} : vector<8x8xi32> to vector<8x1xi32>
    %10 = vector.broadcast %9 : vector<8x1xi32> to vector<8x128xi32>
    %11 = arith.cmpi eq, %10, %4 : vector<8x128xi32>
    %12 = arith.extui %11 : vector<8x128xi1> to vector<8x128xi32>
    %13 = arith.addi %8, %12 : vector<8x128xi32>
    %14 = vector.extract_strided_slice %7 {offsets = [0, 1], sizes = [8, 1], strides = [1, 1]} : vector<8x8xi32> to vector<8x1xi32>
    %15 = vector.broadcast %14 : vector<8x1xi32> to vector<8x128xi32>
    %16 = arith.cmpi eq, %15, %4 : vector<8x128xi32>
    %17 = arith.extui %16 : vector<8x128xi1> to vector<8x128xi32>
    %18 = arith.addi %13, %17 : vector<8x128xi32>
    %19 = vector.extract_strided_slice %7 {offsets = [0, 2], sizes = [8, 1], strides = [1, 1]} : vector<8x8xi32> to vector<8x1xi32>
    %20 = vector.broadcast %19 : vector<8x1xi32> to vector<8x128xi32>
    %21 = arith.cmpi eq, %20, %4 : vector<8x128xi32>
    %22 = arith.extui %21 : vector<8x128xi1> to vector<8x128xi32>
    %23 = arith.addi %18, %22 : vector<8x128xi32>
    %24 = vector.extract_strided_slice %7 {offsets = [0, 3], sizes = [8, 1], strides = [1, 1]} : vector<8x8xi32> to vector<8x1xi32>
    %25 = vector.broadcast %24 : vector<8x1xi32> to vector<8x128xi32>
    %26 = arith.cmpi eq, %25, %4 : vector<8x128xi32>
    %27 = arith.extui %26 : vector<8x128xi1> to vector<8x128xi32>
    %28 = arith.addi %23, %27 : vector<8x128xi32>
    %29 = vector.extract_strided_slice %7 {offsets = [0, 4], sizes = [8, 1], strides = [1, 1]} : vector<8x8xi32> to vector<8x1xi32>
    %30 = vector.broadcast %29 : vector<8x1xi32> to vector<8x128xi32>
    %31 = arith.cmpi eq, %30, %4 : vector<8x128xi32>
    %32 = arith.extui %31 : vector<8x128xi1> to vector<8x128xi32>
    %33 = arith.addi %28, %32 : vector<8x128xi32>
    %34 = vector.extract_strided_slice %7 {offsets = [0, 5], sizes = [8, 1], strides = [1, 1]} : vector<8x8xi32> to vector<8x1xi32>
    %35 = vector.broadcast %34 : vector<8x1xi32> to vector<8x128xi32>
    %36 = arith.cmpi eq, %35, %4 : vector<8x128xi32>
    %37 = arith.extui %36 : vector<8x128xi1> to vector<8x128xi32>
    %38 = arith.addi %33, %37 : vector<8x128xi32>
    %39 = vector.extract_strided_slice %7 {offsets = [0, 6], sizes = [8, 1], strides = [1, 1]} : vector<8x8xi32> to vector<8x1xi32>
    %40 = vector.broadcast %39 : vector<8x1xi32> to vector<8x128xi32>
    %41 = arith.cmpi eq, %40, %4 : vector<8x128xi32>
    %42 = arith.extui %41 : vector<8x128xi1> to vector<8x128xi32>
    %43 = arith.addi %38, %42 : vector<8x128xi32>
    %44 = vector.extract_strided_slice %7 {offsets = [0, 7], sizes = [8, 1], strides = [1, 1]} : vector<8x8xi32> to vector<8x1xi32>
    %45 = vector.broadcast %44 : vector<8x1xi32> to vector<8x128xi32>
    %46 = arith.cmpi eq, %45, %4 : vector<8x128xi32>
    %47 = arith.extui %46 : vector<8x128xi1> to vector<8x128xi32>
    %48 = arith.addi %43, %47 : vector<8x128xi32>
    %c0_3 = arith.constant 0 : index
    %c0_4 = arith.constant 0 : index
    %49 = vector.load %arg5[%c0_3, %c0_4] : memref<8x128xf32, #tpu.memory_space<vmem>>, vector<8x128xf32>
    %50 = arith.sitofp %48 : vector<8x128xi32> to vector<8x128xbf16>
    %c0_5 = arith.constant 0 : index
    %c0_6 = arith.constant 0 : index
    %51 = vector.load %arg3[%c0_5, %c0_6] : memref<128x128xf32, #tpu.memory_space<vmem>>, vector<128x128xf32>
    %52 = arith.truncf %51 : vector<128x128xf32> to vector<128x128xbf16>
    %cst = arith.constant dense<0.000000e+00> : vector<8x128xf32>
    %53 = tpu.matmul %50, %52, %cst {dimension_numbers = #tpu.dot_dimension_numbers<[1], [0], [0], [1], [0, 0, 1, 1], [], []>} : vector<8x128xbf16>, vector<128x128xbf16>, vector<8x128xf32> -> vector<8x128xf32>
    %54 = arith.addf %49, %53 : vector<8x128xf32>
    %c0_7 = arith.constant 0 : index
    %c0_8 = arith.constant 0 : index
    %55 = vector.load %arg5[%c0_7, %c0_8] : memref<8x128xf32, #tpu.memory_space<vmem>>, vector<8x128xf32>
    tpu.vector_store %arg5[%c0_7, %c0_8], %54 {strides = array<i32>} : memref<8x128xf32, #tpu.memory_space<vmem>>, vector<8x128xf32>,
    %c0_i32_9 = arith.constant 0 : i32
    %56 = arith.cmpi eq, %arg1, %c0_i32_9 : i32
    %57 = arith.extui %56 : i1 to i32
    %c0_i32_10 = arith.constant 0 : i32
    %58 = arith.cmpi ne, %57, %c0_i32_10 : i32
    scf.if %58 {
      %c0_11 = arith.constant 0 : index
      %c0_12 = arith.constant 0 : index
      %59 = vector.load %arg5[%c0_11, %c0_12] : memref<8x128xf32, #tpu.memory_space<vmem>>, vector<8x128xf32>
      %c0_13 = arith.constant 0 : index
      %c0_14 = arith.constant 0 : index
      %60 = vector.load %arg4[%c0_13, %c0_14] : memref<1x128xf32, #tpu.memory_space<vmem>>, vector<1x128xf32>
      %61 = vector.broadcast %60 : vector<1x128xf32> to vector<8x128xf32>
      %62 = arith.addf %59, %61 : vector<8x128xf32>
      %c0_15 = arith.constant 0 : index
      %c0_16 = arith.constant 0 : index
      %63 = vector.load %arg5[%c0_15, %c0_16] : memref<8x128xf32, #tpu.memory_space<vmem>>, vector<8x128xf32>
      tpu.vector_store %arg5[%c0_15, %c0_16], %62 {strides = array<i32>} : memref<8x128xf32, #tpu.memory_space<vmem>>, vector<8x128xf32>,
    } else {
    }
    return
  }
  func.func @transform_0(%arg0: i32, %arg1: i32) -> (i32, i32) {
    %c0_i32 = arith.constant 0 : i32
    %c0_i32_0 = arith.constant 0 : i32
    return %arg0, %c0_i32 : i32, i32
  }
  func.func @transform_1(%arg0: i32, %arg1: i32) -> (i32, i32) {
    %c0_i32 = arith.constant 0 : i32
    %c0_i32_0 = arith.constant 0 : i32
    return %arg1, %c0_i32 : i32, i32
  }
  func.func @transform_2(%arg0: i32, %arg1: i32) -> (i32, i32) {
    %c0_i32 = arith.constant 0 : i32
    %c0_i32_0 = arith.constant 0 : i32
    %c0_i32_1 = arith.constant 0 : i32
    return %c0_i32, %c0_i32_0 : i32, i32
  }
  func.func @transform_3(%arg0: i32, %arg1: i32) -> (i32, i32) {
    %c0_i32 = arith.constant 0 : i32
    %c0_i32_0 = arith.constant 0 : i32
    return %arg0, %c0_i32 : i32, i32
  }
}

</mosaic_0001>

<llo_original>
// kernel: _bow_matmul.1
$region0: #{_bow_matmul.1}
  #allocation0 [shape = 'u32[]', space=smem, size = 0x4, offset = 0x4, fixed_abs, tag = 'smem constant byte address 0x4 - core index']
  #allocation1 [shape = 'u32[144,128]{1,0:T(1,128)}', space=vmem, size = 0x12000, scoped, tag = 'internal scratch']
  %s0 = inlined_call_operand.vmem [shape: s32[8,8], index: 0, kind: input, shape index: {}]
  %s1 = inlined_call_operand.vmem [shape: f32[128,128], index: 1, kind: input, shape index: {}]
  %s2 = inlined_call_operand.vmem [shape: f32[1,128], index: 2, kind: input, shape index: {}]
  %s3 = inlined_call_operand.vmem [shape: f32[8,128], index: 3, kind: output, shape index: {}]
  %s4 = sld [smem:[#allocation0]]
  $region30: #{_bow_matmul.1} parent=0
    _
  %s6 = ssub.s32 1, %s4
  %s7 = scalar_select 0, %s6, %s4
  // Predicated region
  $region2: #{_bow_matmul.1} parent=0 // pred_check
    _
  $region3: #{_bow_matmul.1} parent=0 // pred_check_branch
    %9 = sbr.rel (0) target = $region5
  $region4: #{_bow_matmul.1} parent=0 // pred_region
    _
  $region5: #{_bow_matmul.1} parent=0 // pred_fallthru
    _
  // Predicated region
  $region6: #{_bow_matmul.1} parent=0 // pred_check
    _
  $region7: #{_bow_matmul.1} parent=0 // pred_check_branch
    %11 = sbr.rel (0) target = $region9
  $region8: #{_bow_matmul.1} parent=0 // pred_region
    _
  $region9: #{_bow_matmul.1} parent=0 // pred_fallthru
    _
  // Predicated region
  $region10: #{_bow_matmul.1} parent=0 // pred_check
    _
  $region11: #{_bow_matmul.1} parent=0 // pred_check_branch
    %13 = sbr.rel (0) target = $region13
  $region12: #{_bow_matmul.1} parent=0 // pred_region
    _
  $region13: #{_bow_matmul.1} parent=0 // pred_fallthru
    _
  %p15 = scmp.eq.s32.totalorder 0, 0
  // Predicated region
  $region14: #{_bow_matmul.1} parent=0 // pred_check
    %p16 = pneg %p15
  $region15: #{_bow_matmul.1} parent=0 // pred_check_branch
    %18 = sbr.rel (%p16) target = $region17
  $region16: #{_bow_matmul.1} parent=0 // pred_region
    %19 = vst [vmem:[%s3] sm:$0xff] 0.0
  $region17: #{_bow_matmul.1} parent=0 // pred_fallthru
    _
  %v20 = vld [vmem:[%s0] sm:$0xff]
  %v21 = vlaneseq
  %v22 = vand.u32 %v21, 127
  %s23 = smul.u32 0, 128
  %v24 = vstv %s23
  %v25 = vsub.s32 %v20, %v24
  %26 = vset.pattern.permute.xlu0 0
  %27 = vperm.xlu0 %26, %v25
  %v28 = vpop.permute.xlu0 %27
  %vm29 = vcmp.eq.s32.totalorder %v28, %v22
  %v30 = vsel %vm29, 1, 0
  %31 = vset.pattern.permute.xlu0 1
  %32 = vperm.xlu0 %31, %v25
  %v33 = vpop.permute.xlu0 %32
  %vm34 = vcmp.eq.s32.totalorder %v33, %v22
  %v35 = vsel %vm34, 1, 0
  %v36 = vadd.s32 %v30, %v35
  %37 = vset.pattern.permute.xlu0 2
  %38 = vperm.xlu0 %37, %v25
  %v39 = vpop.permute.xlu0 %38
  %vm40 = vcmp.eq.s32.totalorder %v39, %v22
  %v41 = vsel %vm40, 1, 0
  %v42 = vadd.s32 %v36, %v41
  %43 = vset.pattern.permute.xlu0 3
  %44 = vperm.xlu0 %43, %v25
  %v45 = vpop.permute.xlu0 %44
  %vm46 = vcmp.eq.s32.totalorder %v45, %v22
  %v47 = vsel %vm46, 1, 0
  %v48 = vadd.s32 %v42, %v47
  %49 = vset.pattern.permute.xlu0 4
  %50 = vperm.xlu0 %49, %v25
  %v51 = vpop.permute.xlu0 %50
  %vm52 = vcmp.eq.s32.totalorder %v51, %v22
  %v53 = vsel %vm52, 1, 0
  %v54 = vadd.s32 %v48, %v53
  %55 = vset.pattern.permute.xlu0 5
  %56 = vperm.xlu0 %55, %v25
  %v57 = vpop.permute.xlu0 %56
  %vm58 = vcmp.eq.s32.totalorder %v57, %v22
  %v59 = vsel %vm58, 1, 0
  %v60 = vadd.s32 %v54, %v59
  %61 = vset.pattern.permute.xlu0 6
  %62 = vperm.xlu0 %61, %v25
  %v63 = vpop.permute.xlu0 %62
  %vm64 = vcmp.eq.s32.totalorder %v63, %v22
  %v65 = vsel %vm64, 1, 0
  %v66 = vadd.s32 %v60, %v65
  %67 = vset.pattern.permute.xlu0 7
  %68 = vperm.xlu0 %67, %v25
  %v69 = vpop.permute.xlu0 %68
  %vm70 = vcmp.eq.s32.totalorder %v69, %v22
  %v71 = vsel %vm70, 1, 0
  %v72 = vadd.s32 %v66, %v71
  %v73 = vld [vmem:[%s3] sm:$0xff]
  %v74 = vcvt.s32.f32 %v72
  %v75 = vpack.c.bf16 %v74, %v74
  %v76 = vld [vmem:[%s1] sm:$0xff]
  %v77 = vld [vmem:[%s1 + $0x8] sm:$0xff]
  %v78 = vld [vmem:[%s1 + $0x10] sm:$0xff]
  %v79 = vld [vmem:[%s1 + $0x18] sm:$0xff]
  %v80 = vld [vmem:[%s1 + $0x20] sm:$0xff]
  %v81 = vld [vmem:[%s1 + $0x28] sm:$0xff]
  %v82 = vld [vmem:[%s1 + $0x30] sm:$0xff]
  %v83 = vld [vmem:[%s1 + $0x38] sm:$0xff]
  %v84 = vld [vmem:[%s1 + $0x40] sm:$0xff]
  %v85 = vld [vmem:[%s1 + $0x48] sm:$0xff]
  %v86 = vld [vmem:[%s1 + $0x50] sm:$0xff]
  %v87 = vld [vmem:[%s1 + $0x58] sm:$0xff]
  %v88 = vld [vmem:[%s1 + $0x60] sm:$0xff]
  %v89 = vld [vmem:[%s1 + $0x68] sm:$0xff]
  %v90 = vld [vmem:[%s1 + $0x70] sm:$0xff]
  %v91 = vld [vmem:[%s1 + $0x78] sm:$0xff]
  %v92 = vpack.c.bf16 %v77, %v76
  %v93 = vpack.c.bf16 %v79, %v78
  %v94 = vpack.c.bf16 %v81, %v80
  %v95 = vpack.c.bf16 %v83, %v82
  %v96 = vpack.c.bf16 %v85, %v84
  %v97 = vpack.c.bf16 %v87, %v86
  %v98 = vpack.c.bf16 %v89, %v88
  %v99 = vpack.c.bf16 %v91, %v90
  %100 = vmatprep.subr.bf16.mxu0 0
  %101 = vmatpush1.bf16.msra.mxu0 %v99
  %102 = vmatprep.subr.bf16.mxu0 0
  %103 = vmatpush1.bf16.msra.mxu0 %v98
  %104 = vmatprep.subr.bf16.mxu0 0
  %105 = vmatpush1.bf16.msra.mxu0 %v97
  %106 = vmatprep.subr.bf16.mxu0 0
  %107 = vmatpush1.bf16.msra.mxu0 %v96
  %108 = vmatprep.subr.bf16.mxu0 0
  %109 = vmatpush1.bf16.msra.mxu0 %v95
  %110 = vmatprep.subr.bf16.mxu0 0
  %111 = vmatpush1.bf16.msra.mxu0 %v94
  %112 = vmatprep.subr.bf16.mxu0 0
  %113 = vmatpush1.bf16.msra.mxu0 %v93
  %114 = vmatprep.subr.bf16.mxu0 0
  %115 = vmatpush1.bf16.msra.mxu0 %v92
  %116 = vmatprep.subr.bf16.mxu0 0
  %117 = vmatpush2.bf16.msra.mxu0 0
  %118 = vmatprep.subr.bf16.mxu0 0
  %119 = vmatpush2.bf16.msra.mxu0 0
  %120 = vmatprep.subr.bf16.mxu0 0
  %121 = vmatpush2.bf16.msra.mxu0 0
  %122 = vmatprep.subr.bf16.mxu0 0
  %123 = vmatpush2.bf16.msra.mxu0 0
  %124 = vmatprep.subr.bf16.mxu0 0
  %125 = vmatpush2.bf16.msra.mxu0 0
  %126 = vmatprep.subr.bf16.mxu0 0
  %127 = vmatpush2.bf16.msra.mxu0 0
  %128 = vmatprep.subr.bf16.mxu0 0
  %129 = vmatpush2.bf16.msra.mxu0 0
  %130 = vmatprep.subr.bf16.mxu0 0
  %131 = vmatpush2.bf16.msra.mxu0 0
  %132 = vmatprep.mubr.bf16.mxu0 0
  %133 = vmatmul.mubr.bf16.gmra.mxu0 %v75
  %v134 = vpop.f32.mrf.mxu0
  %v135 = vadd.f32 0.0, %v134
  %v136 = vpop.f32.mrf.mxu0
  %v137 = vpop.f32.mrf.mxu0
  %v138 = vpop.f32.mrf.mxu0
  %139 = vdwg.mxu0
  %v140 = vadd.f32 %v73, %v135
  %141 = vst [vmem:[%s3] sm:$0xff] %v140
  // Predicated region
  $region18: #{_bow_matmul.1} parent=0 // pred_check
    %p142 = pneg %p15
  $region19: #{_bow_matmul.1} parent=0 // pred_check_branch
    %144 = sbr.rel (%p142) target = $region21
  $region20: #{_bow_matmul.1} parent=0 // pred_region
    %v145 = vld [vmem:[%s3] sm:$0xff]
    %v146 = vld [vmem:[%s2] sm:$0x1]
    %v148 = vlaneseq
    %v149 = vshrl.u32 %v148, 7
    %v150 = vsub.s32 0, %v149
    %v151 = vrot.slane %v146, %v150
    %v153 = vadd.f32 %v145, %v151
    %154 = vst [vmem:[%s3] sm:$0xff] %v153
  $region21: #{_bow_matmul.1} parent=0 // pred_fallthru
    _
  // Predicated region
  $region22: #{_bow_matmul.1} parent=0 // pred_check
    _
  $region23: #{_bow_matmul.1} parent=0 // pred_check_branch
    %156 = sbr.rel (0) target = $region25
  $region24: #{_bow_matmul.1} parent=0 // pred_region
    _
  $region25: #{_bow_matmul.1} parent=0 // pred_fallthru
    _
  // Predicated region
  $region26: #{_bow_matmul.1} parent=0 // pred_check
    _
  $region27: #{_bow_matmul.1} parent=0 // pred_check_branch
    %158 = sbr.rel (0) target = $region29
  $region28: #{_bow_matmul.1} parent=0 // pred_region
    _
  $region29: #{_bow_matmul.1} parent=0 // pred_fallthru
    _

</llo_original>
